<compile_context>
chip_gen: v5e
topology: v5e:2x2
jax: 0.10.0
libtpu: 0.0.40
codegen_flags: <defaults>
</compile_context>

<pallas_src>
import functools

import numpy as np
import jax
import jax.numpy as jnp
from jax.experimental import pallas as pl
from jax.experimental.pallas import tpu as pltpu

EPS = 1e-5
LANE = 128


def _pad_to(n, m=LANE):
    return ((n + m - 1) // m) * m


def _pick_row_tile(R, multiple=16, max_rows=2048):
    """Largest divisor of R that is a multiple of `multiple` and <= max_rows."""
    best = multiple
    t = multiple
    while t <= min(R, max_rows):
        if R % t == 0:
            best = t
        t += multiple
    return best


# ----------------------------------------------------------------------------
# In-kernel helpers
# ----------------------------------------------------------------------------
def _channel_stats(y):
    """Per-channel (sum, sum_of_squares) stacked as a (2, C) block."""
    return jnp.concatenate([jnp.sum(y, axis=0, keepdims=True),
                            jnp.sum(y * y, axis=0, keepdims=True)], axis=0)


# ----------------------------------------------------------------------------
# Pass 1: conv1 (1x1) and shortcut conv (1x1) fused into a single wide matmul.
# Emits y1 (bf16) and per-tile BN partials for both branches; the shortcut
# activation itself is NOT stored (recomputed in pass 4).
# ----------------------------------------------------------------------------
def _pass1_kernel(x_ref, w_ref, y1_ref, st1_ref, sts_ref, *, P_p):
    x = x_ref[...]                                            # (T, Cin_p) bf16
    y = jnp.dot(x, w_ref[...], preferred_element_type=jnp.float32)
    y1 = y[:, :P_p]                                           # conv1 output
    sc = y[:, P_p:]                                           # shortcut output
    y1_ref[...] = y1.astype(y1_ref.dtype)
    st1_ref[...] = _channel_stats(y1)
    sts_ref[...] = _channel_stats(sc)


# ----------------------------------------------------------------------------
# Pass 2: bn1 + relu, then conv2 (3x3, stride=1, pad=1) as a single fused
# im2col matmul.  One image per grid step so pltpu.roll along the flattened
# (h, w) row axis stays inside the image; boundary taps are masked with four
# hoisted (HW, 1) masks.  im2col is built directly in bf16.
# ----------------------------------------------------------------------------
def _pass2_kernel(y1_ref, s1_ref, t1_ref, w2_ref, y2_ref, st2_ref, *, H, W):
    a1 = jnp.maximum(y1_ref[...].astype(jnp.float32) * s1_ref[...] + t1_ref[...],
                     0.0)                                      # (HW, P_p) f32
    HW = H * W

    # Boundary masks, computed once on an (HW, 1) iota.
    r = jax.lax.broadcasted_iota(jnp.int32, (HW, 1), 0)
    hh = r // W
    ww = r % W
    h_mask = {-1: hh >= 1, 0: None, 1: hh <= H - 2}
    w_mask = {-1: ww >= 1, 0: None, 1: ww <= W - 2}

    cols = []
    for dh in (-1, 0, 1):
        for dw in (-1, 0, 1):
            off = dh * W + dw
            shifted = a1 if off == 0 else pltpu.roll(a1, shift=(-off) % HW, axis=0)
            m = h_mask[dh]
            mw = w_mask[dw]
            if m is None:
                m = mw
            elif mw is not None:
                m = m & mw
            if m is not None:
                # Select in f32 (v5e has no bf16 VALU), cast right before matmul.
                shifted = jnp.where(m, shifted, 0.0)
            cols.append(shifted.astype(jnp.bfloat16))

    im2col = jnp.concatenate(cols, axis=1)                     # (HW, 9*P_p) bf16
    # TODO(synk): when planes <= 64, pack two taps per 128-lane group to halve
    # the zero-padded MXU work / im2col buffer.
    y2 = jnp.dot(im2col, w2_ref[...], preferred_element_type=jnp.float32)
    y2_ref[...] = y2.astype(y2_ref.dtype)
    st2_ref[...] = _channel_stats(y2)


# ----------------------------------------------------------------------------
# Pass 3: bn2 + relu, conv3 (1x1); emits raw output (f32) + BN partials.
# ----------------------------------------------------------------------------
def _pass3_kernel(y2_ref, s2_ref, t2_ref, w3_ref, y3_ref, st3_ref):
    a2 = jnp.maximum(y2_ref[...].astype(jnp.float32) * s2_ref[...] + t2_ref[...],
                     0.0)
    y3 = jnp.dot(a2.astype(jnp.bfloat16), w3_ref[...],
                 preferred_element_type=jnp.float32)
    y3_ref[...] = y3
    st3_ref[...] = _channel_stats(y3)


# ----------------------------------------------------------------------------
# Pass 4: recompute shortcut conv (1x1), bn3(main) + bn_s(shortcut) + add + relu.
# ----------------------------------------------------------------------------
def _pass4_kernel(y3_ref, x_ref, ws_ref, s3_ref, t3_ref, ss_ref, ts_ref, o_ref):
    sc = jnp.dot(x_ref[...], ws_ref[...], preferred_element_type=jnp.float32)
    o_ref[...] = jnp.maximum(
        y3_ref[...] * s3_ref[...] + t3_ref[...] + sc * ss_ref[...] + ts_ref[...],
        0.0)


# ----------------------------------------------------------------------------
# Wrapper: layout conversion, 4 gridded pallas_calls, two-pass BN reductions,
# folded BN scale/shift computed between calls.
# ----------------------------------------------------------------------------
def _fold_bn(stats, gamma, beta, inv_count):
    """Fold training-mode BN into per-channel (scale, shift): y*scale + shift.

    Note: variance is E[x^2] - E[x]^2 in f32 (clamped at 0); fine here since
    activations are roughly zero-mean.  Use centered partials if |mean|>>std.
    """
    mean = stats[0:1, :] * inv_count
    var = jnp.maximum(stats[1:2, :] * inv_count - mean * mean, 0.0)
    scale = gamma * jax.lax.rsqrt(var + EPS)
    shift = beta - mean * scale
    return scale, shift


def bottleneck_forward(x_nchw, params, dims):
    N, Cin, H, W = x_nchw.shape
    HW = H * W
    R = N * HW
    Cin_p, P_p, C4_p = dims["Cin_p"], dims["P_p"], dims["C4_p"]
    assert HW % 16 == 0, "H*W must be a multiple of 16 (bf16 sublane tiling)"

    # NCHW -> channels-last rows (R, Cin), lane-padded, bf16 for the MXU.
    # TODO(synk): keep activations channels-last across the whole network to
    # drop this transpose and the final one (each is an extra HBM round trip).
    x_rows = jnp.transpose(x_nchw, (0, 2, 3, 1)).reshape(R, Cin)
    x_rows = jnp.pad(x_rows, ((0, 0), (0, Cin_p - Cin))).astype(jnp.bfloat16)

    inv_count = 1.0 / float(R)
    f32, bf16 = jnp.float32, jnp.bfloat16

    TILE_R = _pick_row_tile(R)            # big row chunks for passes 1/3/4
    GR = R // TILE_R

    # 40 MiB: fits v7x's 64 MiB physical VMEM with headroom; safe on v5e/v6e.
    # TODO(synk): on v7x verify the row/batch grid axis shards across both
    # TensorCores; otherwise switch to pltpu.CORE_PARALLEL / pl.core_map.
    cp = pltpu.CompilerParams(dimension_semantics=("parallel",),
                              vmem_limit_bytes=40 * 1024 * 1024)

    rowT = lambda C: pl.BlockSpec((TILE_R, C), lambda r: (r, 0))     # row-chunk tile
    rowI = lambda C: pl.BlockSpec((HW, C), lambda n: (n, 0))         # per-image tile
    full = lambda *s: pl.BlockSpec(tuple(s), lambda g: (0,) * len(s))  # resident
    statT = lambda C: pl.BlockSpec((None, 2, C), lambda r: (r, 0, 0))  # partial stats
    statI = lambda C: pl.BlockSpec((None, 2, C), lambda n: (n, 0, 0))

    # -- pass 1: fused conv1 + shortcut conv matmul ----------------------------
    y1, st1p, stsp = pl.pallas_call(
        functools.partial(_pass1_kernel, P_p=P_p),
        grid=(GR,),
        in_specs=[rowT(Cin_p), full(Cin_p, P_p + C4_p)],
        out_specs=[rowT(P_p), statT(P_p), statT(C4_p)],
        out_shape=[jax.ShapeDtypeStruct((R, P_p), bf16),
                   jax.ShapeDtypeStruct((GR, 2, P_p), f32),
                   jax.ShapeDtypeStruct((GR, 2, C4_p), f32)],
        compiler_params=cp,
    )(x_rows, params["w1s"])
    s1, t1 = _fold_bn(jnp.sum(st1p, axis=0), params["g1"], params["b1"], inv_count)
    ss, ts = _fold_bn(jnp.sum(stsp, axis=0), params["gs"], params["bs"], inv_count)

    # -- pass 2: bn1/relu + 3x3 conv (bf16 im2col matmul), one image per step --
    y2, st2p = pl.pallas_call(
        functools.partial(_pass2_kernel, H=H, W=W),
        grid=(N,),
        in_specs=[rowI(P_p), full(1, P_p), full(1, P_p), full(9 * P_p, P_p)],
        out_specs=[rowI(P_p), statI(P_p)],
        out_shape=[jax.ShapeDtypeStruct((R, P_p), bf16),
                   jax.ShapeDtypeStruct((N, 2, P_p), f32)],
        compiler_params=cp,
    )(y1, s1, t1, params["w2"])
    s2, t2 = _fold_bn(jnp.sum(st2p, axis=0), params["g2"], params["b2"], inv_count)

    # -- pass 3: bn2/relu + conv3 ----------------------------------------------
    y3, st3p = pl.pallas_call(
        _pass3_kernel,
        grid=(GR,),
        in_specs=[rowT(P_p), full(1, P_p), full(1, P_p), full(P_p, C4_p)],
        out_specs=[rowT(C4_p), statT(C4_p)],
        out_shape=[jax.ShapeDtypeStruct((R, C4_p), f32),
                   jax.ShapeDtypeStruct((GR, 2, C4_p), f32)],
        compiler_params=cp,
    )(y2, s2, t2, params["w3"])
    s3, t3 = _fold_bn(jnp.sum(st3p, axis=0), params["g3"], params["b3"], inv_count)

    # -- pass 4: recompute shortcut, bn3 + bn_s + add + relu -------------------
    out_rows = pl.pallas_call(
        _pass4_kernel,
        grid=(GR,),
        in_specs=[rowT(C4_p), rowT(Cin_p), full(Cin_p, C4_p),
                  full(1, C4_p), full(1, C4_p), full(1, C4_p), full(1, C4_p)],
        out_specs=rowT(C4_p),
        out_shape=jax.ShapeDtypeStruct((R, C4_p), f32),
        compiler_params=cp,
    )(y3, x_rows, params["ws"], s3, t3, ss, ts)

    C4 = dims["C4"]
    out = out_rows[:, :C4].reshape(N, H, W, C4)
    return jnp.transpose(out, (0, 3, 1, 2))


# ----------------------------------------------------------------------------
# Parameter construction / packing.
# ----------------------------------------------------------------------------
def init_params(key, in_planes, planes):
    """Deterministic synthetic parameters with the PyTorch module's shapes."""
    exp = 4
    ks = jax.random.split(key, 12)
    w = lambda k, shape: 0.3 * jax.random.normal(k, shape, jnp.float32)
    return dict(
        c1=w(ks[0], (planes, in_planes, 1, 1)),
        c2=w(ks[1], (planes, planes, 3, 3)),
        c3=w(ks[2], (exp * planes, planes, 1, 1)),
        cs=w(ks[3], (exp * planes, in_planes, 1, 1)),          # shortcut conv
        g1=1.0 + 0.1 * jax.random.normal(ks[4], (planes,), jnp.float32),
        b1=0.1 * jax.random.normal(ks[5], (planes,), jnp.float32),
        g2=1.0 + 0.1 * jax.random.normal(ks[6], (planes,), jnp.float32),
        b2=0.1 * jax.random.normal(ks[7], (planes,), jnp.float32),
        g3=1.0 + 0.1 * jax.random.normal(ks[8], (exp * planes,), jnp.float32),
        b3=0.1 * jax.random.normal(ks[9], (exp * planes,), jnp.float32),
        gs=1.0 + 0.1 * jax.random.normal(ks[10], (exp * planes,), jnp.float32),
        bs=0.1 * jax.random.normal(ks[11], (exp * planes,), jnp.float32),
    )


def pack_params(raw):
    """PyTorch-shaped weights -> lane-padded, bf16 matmul layouts."""
    P = raw["c2"].shape[0]
    Cin = raw["c1"].shape[1]
    C4 = raw["c3"].shape[0]
    Cin_p, P_p, C4_p = _pad_to(Cin), _pad_to(P), _pad_to(C4)

    def pad_mat(m, r, c):
        return jnp.pad(m, ((0, r - m.shape[0]), (0, c - m.shape[1])))

    def pad_vec(v, c):
        return jnp.pad(v.reshape(1, -1), ((0, 0), (0, c - v.shape[0])))

    w1 = pad_mat(jnp.transpose(raw["c1"][:, :, 0, 0]), Cin_p, P_p)
    ws = pad_mat(jnp.transpose(raw["cs"][:, :, 0, 0]), Cin_p, C4_p)
    w3 = pad_mat(jnp.transpose(raw["c3"][:, :, 0, 0]), P_p, C4_p)
    # conv2: (out, in, kh, kw) -> (kh, kw, in, out), tap-major rows of (9*P_p, P_p)
    w2 = jnp.transpose(raw["c2"], (2, 3, 1, 0))
    w2 = jnp.pad(w2, ((0, 0), (0, 0), (0, P_p - P), (0, P_p - P)))
    w2 = w2.reshape(9 * P_p, P_p)
    # Fused pass-1 weight: [conv1 | shortcut] along the output-channel axis.
    w1s = jnp.concatenate([w1, ws], axis=1)

    params = dict(
        w1s=w1s.astype(jnp.bfloat16), ws=ws.astype(jnp.bfloat16),
        w2=w2.astype(jnp.bfloat16), w3=w3.astype(jnp.bfloat16),
        g1=pad_vec(raw["g1"], P_p), b1=pad_vec(raw["b1"], P_p),
        g2=pad_vec(raw["g2"], P_p), b2=pad_vec(raw["b2"], P_p),
        g3=pad_vec(raw["g3"], C4_p), b3=pad_vec(raw["b3"], C4_p),
        gs=pad_vec(raw["gs"], C4_p), bs=pad_vec(raw["bs"], C4_p),
    )
    dims = dict(Cin=Cin, P=P, C4=C4, Cin_p=Cin_p, P_p=P_p, C4_p=C4_p)
    return params, dims


# ----------------------------------------------------------------------------
# Pure-JAX f32 reference (PyTorch forward, training-mode BN).
# ----------------------------------------------------------------------------
def ref_forward(x, raw):
    def conv(a, w, padding=0):
        return jax.lax.conv_general_dilated(
            a, w, window_strides=(1, 1), padding=[(padding, padding)] * 2,
            dimension_numbers=("NCHW", "OIHW", "NCHW"),
            preferred_element_type=jnp.float32)

    def bn(y, g, b):
        mean = jnp.mean(y, axis=(0, 2, 3), keepdims=True)
        var = jnp.mean((y - mean) ** 2, axis=(0, 2, 3), keepdims=True)
        return (y - mean) * jax.lax.rsqrt(var + EPS) * g[None, :, None, None] \
            + b[None, :, None, None]

    out = jax.nn.relu(bn(conv(x, raw["c1"]), raw["g1"], raw["b1"]))
    out = jax.nn.relu(bn(conv(out, raw["c2"], padding=1), raw["g2"], raw["b2"]))
    out = bn(conv(out, raw["c3"]), raw["g3"], raw["b3"])
    sc = bn(conv(x, raw["cs"]), raw["gs"], raw["bs"])
    return jax.nn.relu(out + sc)


if __name__ == "__main__":
    key = jax.random.PRNGKey(0)
    k_x, k_p = jax.random.split(key)

    N, in_planes, planes, H, W = 2, 4, 4, 16, 16
    assert in_planes != 4 * planes, "identity-shortcut variant not implemented"
    x = jax.random.normal(k_x, (N, in_planes, H, W), jnp.float32)

    raw = init_params(k_p, in_planes, planes)
    params, dims = pack_params(raw)

    out = jax.block_until_ready(bottleneck_forward(x, params, dims))
    assert out.shape == (N, 4 * planes, H, W)

    # Validate against the strict f32 PyTorch-equivalent forward.  Tolerances
    # reflect the deliberate precision policy (bf16 MXU inputs and bf16
    # inter-pass storage of y1/y2 across four chained conv+BN stages);
    # typical |err| is ~1e-2 with rare worst-case pixels near ~7e-2.
    ref = ref_forward(x, raw)
    out_np, ref_np = np.asarray(out), np.asarray(ref)
    np.testing.assert_allclose(out_np, ref_np, atol=2e-1, rtol=1e-1)
    assert float(np.mean(np.abs(out_np - ref_np))) < 5e-2

    print("KERNEL_OK")
</pallas_src>

<mosaic_0001>
module attributes {stable_mosaic.version = 11 : i64} {
  func.func @_pass1_kernel(%arg0: i32, %arg1: memref<512x128xbf16, #tpu.memory_space<vmem>>, %arg2: memref<128x256xbf16, #tpu.memory_space<vmem>>, %arg3: memref<512x128xbf16, #tpu.memory_space<vmem>>, %arg4: memref<1x2x128xf32, #tpu.memory_space<vmem>>, %arg5: memref<1x2x128xf32, #tpu.memory_space<vmem>>) attributes {dimension_semantics = [#tpu.dimension_semantics<parallel>], iteration_bounds = array<i64: 1>, scalar_prefetch = 0 : i64, scratch_operands = 0 : i64, tpu.core_type = #tpu.core_type<tc>, window_params = [{transform_indices = @transform_0, window_bounds = array<i64: 512, 128>}, {pipeline_mode = #tpu.pipeline_mode<synchronous>, transform_indices = @transform_1, window_bounds = array<i64: 128, 256>}, {transform_indices = @transform_2, window_bounds = array<i64: 512, 128>}, {transform_indices = @transform_3, window_bounds = array<i64: 1, 2, 128>}, {transform_indices = @transform_4, window_bounds = array<i64: 1, 2, 128>}]} {
    %c0 = arith.constant 0 : index
    %c0_0 = arith.constant 0 : index
    %0 = vector.load %arg1[%c0, %c0_0] : memref<512x128xbf16, #tpu.memory_space<vmem>>, vector<512x128xbf16>
    %c0_1 = arith.constant 0 : index
    %c0_2 = arith.constant 0 : index
    %1 = vector.load %arg2[%c0_1, %c0_2] : memref<128x256xbf16, #tpu.memory_space<vmem>>, vector<128x256xbf16>
    %cst = arith.constant dense<0.000000e+00> : vector<512x256xf32>
    %2 = tpu.matmul %0, %1, %cst {dimension_numbers = #tpu.dot_dimension_numbers<[1], [0], [0], [1], [0, 0, 1, 1], [], []>} : vector<512x128xbf16>, vector<128x256xbf16>, vector<512x256xf32> -> vector<512x256xf32>
    %3 = vector.extract_strided_slice %2 {offsets = [0, 0], sizes = [512, 128], strides = [1, 1]} : vector<512x256xf32> to vector<512x128xf32>
    %4 = vector.extract_strided_slice %2 {offsets = [0, 128], sizes = [512, 128], strides = [1, 1]} : vector<512x256xf32> to vector<512x128xf32>
    %5 = arith.truncf %3 : vector<512x128xf32> to vector<512x128xbf16>
    %c0_3 = arith.constant 0 : index
    %c0_4 = arith.constant 0 : index
    %6 = vector.load %arg3[%c0_3, %c0_4] : memref<512x128xbf16, #tpu.memory_space<vmem>>, vector<512x128xbf16>
    tpu.vector_store %arg3[%c0_3, %c0_4], %5 {strides = array<i32>} : memref<512x128xbf16, #tpu.memory_space<vmem>>, vector<512x128xbf16>,
    %cst_5 = arith.constant dense<0.000000e+00> : vector<128xf32>
    %7 = vector.multi_reduction <add>, %3, %cst_5 [0] : vector<512x128xf32> to vector<128xf32>
    %8 = vector.shape_cast %7 : vector<128xf32> to vector<1x128xf32>
    %9 = arith.mulf %3, %3 : vector<512x128xf32>
    %cst_6 = arith.constant dense<0.000000e+00> : vector<128xf32>
    %10 = vector.multi_reduction <add>, %9, %cst_6 [0] : vector<512x128xf32> to vector<128xf32>
    %11 = vector.shape_cast %10 : vector<128xf32> to vector<1x128xf32>
    %12 = tpu.concatenate %8, %11 in 0 : vector<1x128xf32>, vector<1x128xf32> -> vector<2x128xf32>
    %c0_7 = arith.constant 0 : index
    %c0_8 = arith.constant 0 : index
    %c0_9 = arith.constant 0 : index
    %13 = vector.load %arg4[%c0_7, %c0_8, %c0_9] : memref<1x2x128xf32, #tpu.memory_space<vmem>>, vector<1x2x128xf32>
    %14 = vector.shape_cast %13 : vector<1x2x128xf32> to vector<2x128xf32>
    %15 = vector.shape_cast %12 : vector<2x128xf32> to vector<1x2x128xf32>
    tpu.vector_store %arg4[%c0_7, %c0_8, %c0_9], %15 {strides = array<i32>} : memref<1x2x128xf32, #tpu.memory_space<vmem>>, vector<1x2x128xf32>,
    %cst_10 = arith.constant dense<0.000000e+00> : vector<128xf32>
    %16 = vector.multi_reduction <add>, %4, %cst_10 [0] : vector<512x128xf32> to vector<128xf32>
    %17 = vector.shape_cast %16 : vector<128xf32> to vector<1x128xf32>
    %18 = arith.mulf %4, %4 : vector<512x128xf32>
    %cst_11 = arith.constant dense<0.000000e+00> : vector<128xf32>
    %19 = vector.multi_reduction <add>, %18, %cst_11 [0] : vector<512x128xf32> to vector<128xf32>
    %20 = vector.shape_cast %19 : vector<128xf32> to vector<1x128xf32>
    %21 = tpu.concatenate %17, %20 in 0 : vector<1x128xf32>, vector<1x128xf32> -> vector<2x128xf32>
    %c0_12 = arith.constant 0 : index
    %c0_13 = arith.constant 0 : index
    %c0_14 = arith.constant 0 : index
    %22 = vector.load %arg5[%c0_12, %c0_13, %c0_14] : memref<1x2x128xf32, #tpu.memory_space<vmem>>, vector<1x2x128xf32>
    %23 = vector.shape_cast %22 : vector<1x2x128xf32> to vector<2x128xf32>
    %24 = vector.shape_cast %21 : vector<2x128xf32> to vector<1x2x128xf32>
    tpu.vector_store %arg5[%c0_12, %c0_13, %c0_14], %24 {strides = array<i32>} : memref<1x2x128xf32, #tpu.memory_space<vmem>>, vector<1x2x128xf32>,
    return
  }
  func.func @transform_0(%arg0: i32) -> (i32, i32) {
    %c0_i32 = arith.constant 0 : i32
    %c0_i32_0 = arith.constant 0 : i32
    return %arg0, %c0_i32 : i32, i32
  }
  func.func @transform_1(%arg0: i32) -> (i32, i32) {
    %c0_i32 = arith.constant 0 : i32
    %c0_i32_0 = arith.constant 0 : i32
    %c0_i32_1 = arith.constant 0 : i32
    return %c0_i32, %c0_i32_0 : i32, i32
  }
  func.func @transform_2(%arg0: i32) -> (i32, i32) {
    %c0_i32 = arith.constant 0 : i32
    %c0_i32_0 = arith.constant 0 : i32
    return %arg0, %c0_i32 : i32, i32
  }
  func.func @transform_3(%arg0: i32) -> (i32, i32, i32) {
    %c0_i32 = arith.constant 0 : i32
    %c0_i32_0 = arith.constant 0 : i32
    %c0_i32_1 = arith.constant 0 : i32
    return %arg0, %c0_i32, %c0_i32_0 : i32, i32, i32
  }
  func.func @transform_4(%arg0: i32) -> (i32, i32, i32) {
    %c0_i32 = arith.constant 0 : i32
    %c0_i32_0 = arith.constant 0 : i32
    %c0_i32_1 = arith.constant 0 : i32
    return %arg0, %c0_i32, %c0_i32_0 : i32, i32, i32
  }
}

</mosaic_0001>

<llo_original>
// kernel: tpu_custom_call.1
$region0: #{tpu_custom_call.1}
  #allocation0 [shape = 'u32[]', space=smem, size = 0x4, offset = 0x4, fixed_abs, tag = 'smem constant byte address 0x4 - core index']
  #allocation1 [shape = 'u32[72,128]{1,0:T(1,128)}', space=vmem, size = 0x9000, scoped, tag = 'internal scratch']
  %s0 = inlined_call_operand.hbm [shape: bf16[512,128], index: 0, kind: input, shape index: {}]
  %s1 = inlined_call_operand.hbm [shape: bf16[128,256], index: 1, kind: input, shape index: {}]
  %s2 = inlined_call_operand.hbm [shape: bf16[512,128], index: 2, kind: output, shape index: {0}]
  %s3 = inlined_call_operand.hbm [shape: f32[1,2,128], index: 3, kind: output, shape index: {1}]
  %s4 = inlined_call_operand.hbm [shape: f32[1,2,128], index: 4, kind: output, shape index: {2}]
  %5 = xla_tuple %s2, %s3, %s4
  %s6 = sld [smem:[#allocation0]]
  $region42: #{tpu_custom_call.1} parent=0
    _
  %s8 = ssub.s32 1, %s6
  %s9 = scalar_select 0, %s8, %s6
  $region1: #{tpu_custom_call.1} parent=0
    #allocation2 [shape = 'u8[131072]{0}', space=vmem, size = 0x20000, scoped, tag = 'input window, operand 0, single buffered']
    #allocation3 [shape = 's32[1]{0}', space=sflag, size = 0x4, scoped, tag = 'scoped memory for tpu_custom_call.1']
    #allocation4 [shape = 's32[1]{0}', space=sflag, size = 0x4, scoped, tag = 'scoped memory for tpu_custom_call.1']
    #allocation5 [shape = 'u8[65536]{0}', space=vmem, size = 0x10000, scoped, tag = 'input window, operand 1, single buffered']
    #allocation6 [shape = 's32[1]{0}', space=sflag, size = 0x4, scoped, tag = 'scoped memory for tpu_custom_call.1']
    #allocation7 [shape = 'u8[131072]{0}', space=vmem, size = 0x20000, scoped, tag = 'output window, operand 0, single buffered']
    #allocation8 [shape = 'u8[1024]{0}', space=vmem, size = 0x400, scoped, tag = 'output window, operand 1, single buffered']
    #allocation9 [shape = 's32[1]{0}', space=sflag, size = 0x4, scoped, tag = 'scoped memory for tpu_custom_call.1']
    #allocation10 [shape = 'u8[1024]{0}', space=vmem, size = 0x400, scoped, tag = 'output window, operand 2, single buffered']
    %10 = vsyncpa [#allocation3], 0
    %11 = vsyncpa [#allocation6], 0
    %12 = vsyncpa [#allocation4], 0
    %13 = vsyncpa [#allocation9], 0
    // Predicated region
    $region2: #{tpu_custom_call.1} parent=1 // pred_check
      _
    $region3: #{tpu_custom_call.1} parent=1 // pred_check_branch
      %15 = sbr.rel (0) target = $region5
    $region4: #{tpu_custom_call.1} parent=1 // pred_region
      %17 = vsyncadd [#allocation3], 0
      %s18 = sshll.u32 %s0, 4
      %s19 = int_to_ptr.hbm [resolvable:$true] %s18
      %s20 = sshll.u32 [#allocation2], 4
      %s21 = int_to_ptr.vmem [resolvable:$true] %s20
      %26 = dma.hbm_to_vmem [thread:$0]  %s19, 4096, %s21, [#allocation3], 64, 64, 4
    $region5: #{tpu_custom_call.1} parent=1 // pred_fallthru
      _
    // Predicated region
    $region6: #{tpu_custom_call.1} parent=1 // pred_check
      _
    $region7: #{tpu_custom_call.1} parent=1 // pred_check_branch
      %28 = sbr.rel (0) target = $region9
    $region8: #{tpu_custom_call.1} parent=1 // pred_region
      %30 = vsyncadd [#allocation6], 0
      %s31 = sshll.u32 %s1, 4
      %s32 = int_to_ptr.hbm [resolvable:$true] %s31
      %s33 = sshll.u32 [#allocation5], 4
      %s34 = int_to_ptr.vmem [resolvable:$true] %s33
      %39 = dma.hbm_to_vmem [thread:$0]  %s32, 2048, %s34, [#allocation6], 128, 128, 8
    $region9: #{tpu_custom_call.1} parent=1 // pred_fallthru
      _
    // Predicated region
    $region10: #{tpu_custom_call.1} parent=1 // pred_check
      _
    $region11: #{tpu_custom_call.1} parent=1 // pred_check_branch
      %41 = sbr.rel (0) target = $region13
    $region12: #{tpu_custom_call.1} parent=1 // pred_region
      %43 = dma.done [#allocation3], 4096
    $region13: #{tpu_custom_call.1} parent=1 // pred_fallthru
      _
    // Predicated region
    $region14: #{tpu_custom_call.1} parent=1 // pred_check
      _
    $region15: #{tpu_custom_call.1} parent=1 // pred_check_branch
      %45 = sbr.rel (0) target = $region17
    $region16: #{tpu_custom_call.1} parent=1 // pred_region
      %47 = dma.done [#allocation6], 2048
    $region17: #{tpu_custom_call.1} parent=1 // pred_fallthru
      _
    %v48 = vld [vmem:[#allocation2] sm:$0xf]
    %v49 = vld [vmem:[#allocation2 + $0x4] sm:$0xf]
    %v50 = vld [vmem:[#allocation2 + $0x8] sm:$0xf]
    %v51 = vld [vmem:[#allocation2 + $0xc] sm:$0xf]
    %v52 = vld [vmem:[#allocation2 + $0x10] sm:$0xf]
    %v53 = vld [vmem:[#allocation2 + $0x14] sm:$0xf]
    %v54 = vld [vmem:[#allocation2 + $0x18] sm:$0xf]
    %v55 = vld [vmem:[#allocation2 + $0x1c] sm:$0xf]
    %v56 = vld [vmem:[#allocation2 + $0x20] sm:$0xf]
    %v57 = vld [vmem:[#allocation2 + $0x24] sm:$0xf]
    %v58 = vld [vmem:[#allocation2 + $0x28] sm:$0xf]
    %v59 = vld [vmem:[#allocation2 + $0x2c] sm:$0xf]
    %v60 = vld [vmem:[#allocation2 + $0x30] sm:$0xf]
    %v61 = vld [vmem:[#allocation2 + $0x34] sm:$0xf]
    %v62 = vld [vmem:[#allocation2 + $0x38] sm:$0xf]
    %v63 = vld [vmem:[#allocation2 + $0x3c] sm:$0xf]
    %v64 = vld [vmem:[#allocation2 + $0x40] sm:$0xf]
    %v65 = vld [vmem:[#allocation2 + $0x44] sm:$0xf]
    %v66 = vld [vmem:[#allocation2 + $0x48] sm:$0xf]
    %v67 = vld [vmem:[#allocation2 + $0x4c] sm:$0xf]
    %v68 = vld [vmem:[#allocation2 + $0x50] sm:$0xf]
    %v69 = vld [vmem:[#allocation2 + $0x54] sm:$0xf]
    %v70 = vld [vmem:[#allocation2 + $0x58] sm:$0xf]
    %v71 = vld [vmem:[#allocation2 + $0x5c] sm:$0xf]
    %v72 = vld [vmem:[#allocation2 + $0x60] sm:$0xf]
    %v73 = vld [vmem:[#allocation2 + $0x64] sm:$0xf]
    %v74 = vld [vmem:[#allocation2 + $0x68] sm:$0xf]
    %v75 = vld [vmem:[#allocation2 + $0x6c] sm:$0xf]
    %v76 = vld [vmem:[#allocation2 + $0x70] sm:$0xf]
    %v77 = vld [vmem:[#allocation2 + $0x74] sm:$0xf]
    %v78 = vld [vmem:[#allocation2 + $0x78] sm:$0xf]
    %v79 = vld [vmem:[#allocation2 + $0x7c] sm:$0xf]
    %v80 = vld [vmem:[#allocation2 + $0x80] sm:$0xf]
    %v81 = vld [vmem:[#allocation2 + $0x84] sm:$0xf]
    %v82 = vld [vmem:[#allocation2 + $0x88] sm:$0xf]
    %v83 = vld [vmem:[#allocation2 + $0x8c] sm:$0xf]
    %v84 = vld [vmem:[#allocation2 + $0x90] sm:$0xf]
    %v85 = vld [vmem:[#allocation2 + $0x94] sm:$0xf]
    %v86 = vld [vmem:[#allocation2 + $0x98] sm:$0xf]
    %v87 = vld [vmem:[#allocation2 + $0x9c] sm:$0xf]
    %v88 = vld [vmem:[#allocation2 + $0xa0] sm:$0xf]
    %v89 = vld [vmem:[#allocation2 + $0xa4] sm:$0xf]
    %v90 = vld [vmem:[#allocation2 + $0xa8] sm:$0xf]
    %v91 = vld [vmem:[#allocation2 + $0xac] sm:$0xf]
    %v92 = vld [vmem:[#allocation2 + $0xb0] sm:$0xf]
    %v93 = vld [vmem:[#allocation2 + $0xb4] sm:$0xf]
    %v94 = vld [vmem:[#allocation2 + $0xb8] sm:$0xf]
    %v95 = vld [vmem:[#allocation2 + $0xbc] sm:$0xf]
    %v96 = vld [vmem:[#allocation2 + $0xc0] sm:$0xf]
    %v97 = vld [vmem:[#allocation2 + $0xc4] sm:$0xf]
    %v98 = vld [vmem:[#allocation2 + $0xc8] sm:$0xf]
    %v99 = vld [vmem:[#allocation2 + $0xcc] sm:$0xf]
    %v100 = vld [vmem:[#allocation2 + $0xd0] sm:$0xf]
    %v101 = vld [vmem:[#allocation2 + $0xd4] sm:$0xf]
    %v102 = vld [vmem:[#allocation2 + $0xd8] sm:$0xf]
    %v103 = vld [vmem:[#allocation2 + $0xdc] sm:$0xf]
    %v104 = vld [vmem:[#allocation2 + $0xe0] sm:$0xf]
    %v105 = vld [vmem:[#allocation2 + $0xe4] sm:$0xf]
    %v106 = vld [vmem:[#allocation2 + $0xe8] sm:$0xf]
    %v107 = vld [vmem:[#allocation2 + $0xec] sm:$0xf]
    %v108 = vld [vmem:[#allocation2 + $0xf0] sm:$0xf]
    %v109 = vld [vmem:[#allocation2 + $0xf4] sm:$0xf]
    %v110 = vld [vmem:[#allocation2 + $0xf8] sm:$0xf]
    %v111 = vld [vmem:[#allocation2 + $0xfc] sm:$0xf]
    %v112 = vld [vmem:[#allocation5] sm:$0xff]
    %v113 = vld [vmem:[#allocation5 + $0x8] sm:$0xff]
    %v114 = vld [vmem:[#allocation5 + $0x10] sm:$0xff]
    %v115 = vld [vmem:[#allocation5 + $0x18] sm:$0xff]
    %v116 = vld [vmem:[#allocation5 + $0x20] sm:$0xff]
    %v117 = vld [vmem:[#allocation5 + $0x28] sm:$0xff]
    %v118 = vld [vmem:[#allocation5 + $0x30] sm:$0xff]
    %v119 = vld [vmem:[#allocation5 + $0x38] sm:$0xff]
    %v120 = vld [vmem:[#allocation5 + $0x40] sm:$0xff]
    %v121 = vld [vmem:[#allocation5 + $0x48] sm:$0xff]
    %v122 = vld [vmem:[#allocation5 + $0x50] sm:$0xff]
    %v123 = vld [vmem:[#allocation5 + $0x58] sm:$0xff]
    %v124 = vld [vmem:[#allocation5 + $0x60] sm:$0xff]
    %v125 = vld [vmem:[#allocation5 + $0x68] sm:$0xff]
    %v126 = vld [vmem:[#allocation5 + $0x70] sm:$0xff]
    %v127 = vld [vmem:[#allocation5 + $0x78] sm:$0xff]
    %v192 = vunpack.c.l.b16 %v48
    %v193 = vunpack.c.l.b16 %v49
    %v194 = vunpack.c.l.b16 %v50
    %v195 = vunpack.c.l.b16 %v51
    %v196 = vunpack.c.l.b16 %v52
    %v197 = vunpack.c.l.b16 %v53
    %v198 = vunpack.c.l.b16 %v54
    %v199 = vunpack.c.l.b16 %v55
    %v200 = vunpack.c.l.b16 %v56
    %v201 = vunpack.c.l.b16 %v57
    %v202 = vunpack.c.l.b16 %v58
    %v203 = vunpack.c.l.b16 %v59
    %v204 = vunpack.c.l.b16 %v60
    %v205 = vunpack.c.l.b16 %v61
    %v206 = vunpack.c.l.b16 %v62
    %v207 = vunpack.c.l.b16 %v63
    %v208 = vunpack.c.l.b16 %v64
    %v209 = vunpack.c.l.b16 %v65
    %v210 = vunpack.c.l.b16 %v66
    %v211 = vunpack.c.l.b16 %v67
    %v212 = vunpack.c.l.b16 %v68
    %v213 = vunpack.c.l.b16 %v69
    %v214 = vunpack.c.l.b16 %v70
    %v215 = vunpack.c.l.b16 %v71
    %v216 = vunpack.c.l.b16 %v72
    %v217 = vunpack.c.l.b16 %v73
    %v218 = vunpack.c.l.b16 %v74
    %v219 = vunpack.c.l.b16 %v75
    %v220 = vunpack.c.l.b16 %v76
    %v221 = vunpack.c.l.b16 %v77
    %v222 = vunpack.c.l.b16 %v78
    %v223 = vunpack.c.l.b16 %v79
    %v224 = vunpack.c.l.b16 %v80
    %v225 = vunpack.c.l.b16 %v81
    %v226 = vunpack.c.l.b16 %v82
    %v227 = vunpack.c.l.b16 %v83
    %v228 = vunpack.c.l.b16 %v84
    %v229 = vunpack.c.l.b16 %v85
    %v230 = vunpack.c.l.b16 %v86
    %v231 = vunpack.c.l.b16 %v87
    %v232 = vunpack.c.l.b16 %v88
    %v233 = vunpack.c.l.b16 %v89
    %v234 = vunpack.c.l.b16 %v90
    %v235 = vunpack.c.l.b16 %v91
    %v236 = vunpack.c.l.b16 %v92
    %v237 = vunpack.c.l.b16 %v93
    %v238 = vunpack.c.l.b16 %v94
    %v239 = vunpack.c.l.b16 %v95
    %v240 = vunpack.c.l.b16 %v96
    %v241 = vunpack.c.l.b16 %v97
    %v242 = vunpack.c.l.b16 %v98
    %v243 = vunpack.c.l.b16 %v99
    %v244 = vunpack.c.l.b16 %v100
    %v245 = vunpack.c.l.b16 %v101
    %v246 = vunpack.c.l.b16 %v102
    %v247 = vunpack.c.l.b16 %v103
    %v248 = vunpack.c.l.b16 %v104
    %v249 = vunpack.c.l.b16 %v105
    %v250 = vunpack.c.l.b16 %v106
    %v251 = vunpack.c.l.b16 %v107
    %v252 = vunpack.c.l.b16 %v108
    %v253 = vunpack.c.l.b16 %v109
    %v254 = vunpack.c.l.b16 %v110
    %v255 = vunpack.c.l.b16 %v111
    %v256 = vpack.c.b16 %v193, %v192
    %v257 = vpack.c.b16 %v195, %v194
    %v258 = vpack.c.b16 %v197, %v196
    %v259 = vpack.c.b16 %v199, %v198
    %v260 = vpack.c.b16 %v201, %v200
    %v261 = vpack.c.b16 %v203, %v202
    %v262 = vpack.c.b16 %v205, %v204
    %v263 = vpack.c.b16 %v207, %v206
    %v264 = vpack.c.b16 %v209, %v208
    %v265 = vpack.c.b16 %v211, %v210
    %v266 = vpack.c.b16 %v213, %v212
    %v267 = vpack.c.b16 %v215, %v214
    %v268 = vpack.c.b16 %v217, %v216
    %v269 = vpack.c.b16 %v219, %v218
    %v270 = vpack.c.b16 %v221, %v220
    %v271 = vpack.c.b16 %v223, %v222
    %v272 = vpack.c.b16 %v225, %v224
    %v273 = vpack.c.b16 %v227, %v226
    %v274 = vpack.c.b16 %v229, %v228
    %v275 = vpack.c.b16 %v231, %v230
    %v276 = vpack.c.b16 %v233, %v232
    %v277 = vpack.c.b16 %v235, %v234
    %v278 = vpack.c.b16 %v237, %v236
    %v279 = vpack.c.b16 %v239, %v238
    %v280 = vpack.c.b16 %v241, %v240
    %v281 = vpack.c.b16 %v243, %v242
    %v282 = vpack.c.b16 %v245, %v244
    %v283 = vpack.c.b16 %v247, %v246
    %v284 = vpack.c.b16 %v249, %v248
    %v285 = vpack.c.b16 %v251, %v250
    %v286 = vpack.c.b16 %v253, %v252
    %v287 = vpack.c.b16 %v255, %v254
    %v336 = vunpack.c.l.b16 %v112
    %v337 = vunpack.c.h.b16 %v112
    %v338 = vunpack.c.l.b16 %v113
    %v339 = vunpack.c.h.b16 %v113
    %v340 = vunpack.c.l.b16 %v114
    %v341 = vunpack.c.h.b16 %v114
    %v342 = vunpack.c.l.b16 %v115
    %v343 = vunpack.c.h.b16 %v115
    %v344 = vunpack.c.l.b16 %v116
    %v345 = vunpack.c.h.b16 %v116
    %v346 = vunpack.c.l.b16 %v117
    %v347 = vunpack.c.h.b16 %v117
    %v348 = vunpack.c.l.b16 %v118
    %v349 = vunpack.c.h.b16 %v118
    %v350 = vunpack.c.l.b16 %v119
    %v351 = vunpack.c.h.b16 %v119
    %v352 = vunpack.c.l.b16 %v120
    %v353 = vunpack.c.h.b16 %v120
    %v354 = vunpack.c.l.b16 %v121
    %v355 = vunpack.c.h.b16 %v121
    %v356 = vunpack.c.l.b16 %v122
    %v357 = vunpack.c.h.b16 %v122
    %v358 = vunpack.c.l.b16 %v123
    %v359 = vunpack.c.h.b16 %v123
    %v360 = vunpack.c.l.b16 %v124
    %v361 = vunpack.c.h.b16 %v124
    %v362 = vunpack.c.l.b16 %v125
    %v363 = vunpack.c.h.b16 %v125
    %v364 = vunpack.c.l.b16 %v126
    %v365 = vunpack.c.h.b16 %v126
    %v366 = vunpack.c.l.b16 %v127
    %v367 = vunpack.c.h.b16 %v127
    %v368 = vpack.c.b16 %v338, %v336
    %v369 = vpack.c.b16 %v339, %v337
    %v370 = vpack.c.b16 %v342, %v340
    %v371 = vpack.c.b16 %v343, %v341
    %v372 = vpack.c.b16 %v346, %v344
    %v373 = vpack.c.b16 %v347, %v345
    %v374 = vpack.c.b16 %v350, %v348
    %v375 = vpack.c.b16 %v351, %v349
    %v376 = vpack.c.b16 %v354, %v352
    %v377 = vpack.c.b16 %v355, %v353
    %v378 = vpack.c.b16 %v358, %v356
    %v379 = vpack.c.b16 %v359, %v357
    %v380 = vpack.c.b16 %v362, %v360
    %v381 = vpack.c.b16 %v363, %v361
    %v382 = vpack.c.b16 %v366, %v364
    %v383 = vpack.c.b16 %v367, %v365
    %400 = vmatpush.bf16.msra.mxu0 %v382
    %401 = vmatpush.bf16.msra.mxu0 %v380
    %402 = vmatpush.bf16.msra.mxu0 %v378
    %403 = vmatpush.bf16.msra.mxu0 %v376
    %404 = vmatpush.bf16.msra.mxu0 %v374
    %405 = vmatpush.bf16.msra.mxu0 %v372
    %406 = vmatpush.bf16.msra.mxu0 %v370
    %407 = vmatpush.bf16.msra.mxu0 %v368
    %408 = vmatmul.bf16.gmra.mxu0 %v256
    %v409 = vpop.f32.mrf.mxu0
    %v410 = vadd.f32 0.0, %v409
    %v411 = vpop.f32.mrf.mxu0
    %v412 = vadd.f32 0.0, %v411
    %413 = vmatmul.bf16.gmra.mxu0 %v257
    %v414 = vpop.f32.mrf.mxu0
    %v415 = vadd.f32 0.0, %v414
    %v416 = vpop.f32.mrf.mxu0
    %v417 = vadd.f32 0.0, %v416
    %418 = vmatmul.bf16.gmra.mxu0 %v258
    %v419 = vpop.f32.mrf.mxu0
    %v420 = vadd.f32 0.0, %v419
    %v421 = vpop.f32.mrf.mxu0
    %v422 = vadd.f32 0.0, %v421
    %423 = vmatmul.bf16.gmra.mxu0 %v259
    %v424 = vpop.f32.mrf.mxu0
    %v425 = vadd.f32 0.0, %v424
    %v426 = vpop.f32.mrf.mxu0
    %v427 = vadd.f32 0.0, %v426
    %428 = vmatmul.bf16.gmra.mxu0 %v260
    %v429 = vpop.f32.mrf.mxu0
    %v430 = vadd.f32 0.0, %v429
    %v431 = vpop.f32.mrf.mxu0
    %v432 = vadd.f32 0.0, %v431
    %433 = vmatmul.bf16.gmra.mxu0 %v261
    %v434 = vpop.f32.mrf.mxu0
    %v435 = vadd.f32 0.0, %v434
    %v436 = vpop.f32.mrf.mxu0
    %v437 = vadd.f32 0.0, %v436
    %438 = vmatmul.bf16.gmra.mxu0 %v262
    %v439 = vpop.f32.mrf.mxu0
    %v440 = vadd.f32 0.0, %v439
    %v441 = vpop.f32.mrf.mxu0
    %v442 = vadd.f32 0.0, %v441
    %443 = vmatmul.bf16.gmra.mxu0 %v263
    %v444 = vpop.f32.mrf.mxu0
    %v445 = vadd.f32 0.0, %v444
    %v446 = vpop.f32.mrf.mxu0
    %v447 = vadd.f32 0.0, %v446
    %448 = vmatmul.bf16.gmra.mxu0 %v264
    %v449 = vpop.f32.mrf.mxu0
    %v450 = vadd.f32 0.0, %v449
    %v451 = vpop.f32.mrf.mxu0
    %v452 = vadd.f32 0.0, %v451
    %453 = vmatmul.bf16.gmra.mxu0 %v265
    %v454 = vpop.f32.mrf.mxu0
    %v455 = vadd.f32 0.0, %v454
    %v456 = vpop.f32.mrf.mxu0
    %v457 = vadd.f32 0.0, %v456
    %458 = vmatmul.bf16.gmra.mxu0 %v266
    %v459 = vpop.f32.mrf.mxu0
    %v460 = vadd.f32 0.0, %v459
    %v461 = vpop.f32.mrf.mxu0
    %v462 = vadd.f32 0.0, %v461
    %463 = vmatmul.bf16.gmra.mxu0 %v267
    %v464 = vpop.f32.mrf.mxu0
    %v465 = vadd.f32 0.0, %v464
    %v466 = vpop.f32.mrf.mxu0
    %v467 = vadd.f32 0.0, %v466
    %468 = vmatmul.bf16.gmra.mxu0 %v268
    %v469 = vpop.f32.mrf.mxu0
    %v470 = vadd.f32 0.0, %v469
    %v471 = vpop.f32.mrf.mxu0
    %v472 = vadd.f32 0.0, %v471
    %473 = vmatmul.bf16.gmra.mxu0 %v269
    %v474 = vpop.f32.mrf.mxu0
    %v475 = vadd.f32 0.0, %v474
    %v476 = vpop.f32.mrf.mxu0
    %v477 = vadd.f32 0.0, %v476
    %478 = vmatmul.bf16.gmra.mxu0 %v270
    %v479 = vpop.f32.mrf.mxu0
    %v480 = vadd.f32 0.0, %v479
    %v481 = vpop.f32.mrf.mxu0
    %v482 = vadd.f32 0.0, %v481
    %483 = vmatmul.bf16.gmra.mxu0 %v271
    %v484 = vpop.f32.mrf.mxu0
    %v485 = vadd.f32 0.0, %v484
    %v486 = vpop.f32.mrf.mxu0
    %v487 = vadd.f32 0.0, %v486
    %488 = vmatmul.bf16.gmra.mxu0 %v272
    %v489 = vpop.f32.mrf.mxu0
    %v490 = vadd.f32 0.0, %v489
    %v491 = vpop.f32.mrf.mxu0
    %v492 = vadd.f32 0.0, %v491
    %493 = vmatmul.bf16.gmra.mxu0 %v273
    %v494 = vpop.f32.mrf.mxu0
    %v495 = vadd.f32 0.0, %v494
    %v496 = vpop.f32.mrf.mxu0
    %v497 = vadd.f32 0.0, %v496
    %498 = vmatmul.bf16.gmra.mxu0 %v274
    %v499 = vpop.f32.mrf.mxu0
    %v500 = vadd.f32 0.0, %v499
    %v501 = vpop.f32.mrf.mxu0
    %v502 = vadd.f32 0.0, %v501
    %503 = vmatmul.bf16.gmra.mxu0 %v275
    %v504 = vpop.f32.mrf.mxu0
    %v505 = vadd.f32 0.0, %v504
    %v506 = vpop.f32.mrf.mxu0
    %v507 = vadd.f32 0.0, %v506
    %508 = vmatmul.bf16.gmra.mxu0 %v276
    %v509 = vpop.f32.mrf.mxu0
    %v510 = vadd.f32 0.0, %v509
    %v511 = vpop.f32.mrf.mxu0
    %v512 = vadd.f32 0.0, %v511
    %513 = vmatmul.bf16.gmra.mxu0 %v277
    %v514 = vpop.f32.mrf.mxu0
    %v515 = vadd.f32 0.0, %v514
    %v516 = vpop.f32.mrf.mxu0
    %v517 = vadd.f32 0.0, %v516
    %518 = vmatmul.bf16.gmra.mxu0 %v278
    %v519 = vpop.f32.mrf.mxu0
    %v520 = vadd.f32 0.0, %v519
    %v521 = vpop.f32.mrf.mxu0
    %v522 = vadd.f32 0.0, %v521
    %523 = vmatmul.bf16.gmra.mxu0 %v279
    %v524 = vpop.f32.mrf.mxu0
    %v525 = vadd.f32 0.0, %v524
    %v526 = vpop.f32.mrf.mxu0
    %v527 = vadd.f32 0.0, %v526
    %528 = vmatmul.bf16.gmra.mxu0 %v280
    %v529 = vpop.f32.mrf.mxu0
    %v530 = vadd.f32 0.0, %v529
    %v531 = vpop.f32.mrf.mxu0
    %v532 = vadd.f32 0.0, %v531
    %533 = vmatmul.bf16.gmra.mxu0 %v281
    %v534 = vpop.f32.mrf.mxu0
    %v535 = vadd.f32 0.0, %v534
    %v536 = vpop.f32.mrf.mxu0
    %v537 = vadd.f32 0.0, %v536
    %538 = vmatmul.bf16.gmra.mxu0 %v282
    %v539 = vpop.f32.mrf.mxu0
    %v540 = vadd.f32 0.0, %v539
    %v541 = vpop.f32.mrf.mxu0
    %v542 = vadd.f32 0.0, %v541
    %543 = vmatmul.bf16.gmra.mxu0 %v283
    %v544 = vpop.f32.mrf.mxu0
    %v545 = vadd.f32 0.0, %v544
    %v546 = vpop.f32.mrf.mxu0
    %v547 = vadd.f32 0.0, %v546
    %548 = vmatmul.bf16.gmra.mxu0 %v284
    %v549 = vpop.f32.mrf.mxu0
    %v550 = vadd.f32 0.0, %v549
    %v551 = vpop.f32.mrf.mxu0
    %v552 = vadd.f32 0.0, %v551
    %553 = vmatmul.bf16.gmra.mxu0 %v285
    %v554 = vpop.f32.mrf.mxu0
    %v555 = vadd.f32 0.0, %v554
    %v556 = vpop.f32.mrf.mxu0
    %v557 = vadd.f32 0.0, %v556
    %558 = vmatmul.bf16.gmra.mxu0 %v286
    %v559 = vpop.f32.mrf.mxu0
    %v560 = vadd.f32 0.0, %v559
    %v561 = vpop.f32.mrf.mxu0
    %v562 = vadd.f32 0.0, %v561
    %563 = vmatmul.bf16.gmra.mxu0 %v287
    %v564 = vpop.f32.mrf.mxu0
    %v565 = vadd.f32 0.0, %v564
    %v566 = vpop.f32.mrf.mxu0
    %v567 = vadd.f32 0.0, %v566
    %568 = vdwg.mxu0
    %569 = vmatpush.bf16.msra.mxu0 %v383
    %570 = vmatpush.bf16.msra.mxu0 %v381
    %571 = vmatpush.bf16.msra.mxu0 %v379
    %572 = vmatpush.bf16.msra.mxu0 %v377
    %573 = vmatpush.bf16.msra.mxu0 %v375
    %574 = vmatpush.bf16.msra.mxu0 %v373
    %575 = vmatpush.bf16.msra.mxu0 %v371
    %576 = vmatpush.bf16.msra.mxu0 %v369
    %577 = vmatmul.bf16.gmra.mxu0 %v256
    %v578 = vpop.f32.mrf.mxu0
    %v579 = vadd.f32 0.0, %v578
    %v580 = vpop.f32.mrf.mxu0
    %v581 = vadd.f32 0.0, %v580
    %582 = vmatmul.bf16.gmra.mxu0 %v257
    %v583 = vpop.f32.mrf.mxu0
    %v584 = vadd.f32 0.0, %v583
    %v585 = vpop.f32.mrf.mxu0
    %v586 = vadd.f32 0.0, %v585
    %587 = vmatmul.bf16.gmra.mxu0 %v258
    %v588 = vpop.f32.mrf.mxu0
    %v589 = vadd.f32 0.0, %v588
    %v590 = vpop.f32.mrf.mxu0
    %v591 = vadd.f32 0.0, %v590
    %592 = vmatmul.bf16.gmra.mxu0 %v259
    %v593 = vpop.f32.mrf.mxu0
    %v594 = vadd.f32 0.0, %v593
    %v595 = vpop.f32.mrf.mxu0
    %v596 = vadd.f32 0.0, %v595
    %597 = vmatmul.bf16.gmra.mxu0 %v260
    %v598 = vpop.f32.mrf.mxu0
    %v599 = vadd.f32 0.0, %v598
    %v600 = vpop.f32.mrf.mxu0
    %v601 = vadd.f32 0.0, %v600
    %602 = vmatmul.bf16.gmra.mxu0 %v261
    %v603 = vpop.f32.mrf.mxu0
    %v604 = vadd.f32 0.0, %v603
    %v605 = vpop.f32.mrf.mxu0
    %v606 = vadd.f32 0.0, %v605
    %607 = vmatmul.bf16.gmra.mxu0 %v262
    %v608 = vpop.f32.mrf.mxu0
    %v609 = vadd.f32 0.0, %v608
    %v610 = vpop.f32.mrf.mxu0
    %v611 = vadd.f32 0.0, %v610
    %612 = vmatmul.bf16.gmra.mxu0 %v263
    %v613 = vpop.f32.mrf.mxu0
    %v614 = vadd.f32 0.0, %v613
    %v615 = vpop.f32.mrf.mxu0
    %v616 = vadd.f32 0.0, %v615
    %617 = vmatmul.bf16.gmra.mxu0 %v264
    %v618 = vpop.f32.mrf.mxu0
    %v619 = vadd.f32 0.0, %v618
    %v620 = vpop.f32.mrf.mxu0
    %v621 = vadd.f32 0.0, %v620
    %622 = vmatmul.bf16.gmra.mxu0 %v265
    %v623 = vpop.f32.mrf.mxu0
    %v624 = vadd.f32 0.0, %v623
    %v625 = vpop.f32.mrf.mxu0
    %v626 = vadd.f32 0.0, %v625
    %627 = vmatmul.bf16.gmra.mxu0 %v266
    %v628 = vpop.f32.mrf.mxu0
    %v629 = vadd.f32 0.0, %v628
    %v630 = vpop.f32.mrf.mxu0
    %v631 = vadd.f32 0.0, %v630
    %632 = vmatmul.bf16.gmra.mxu0 %v267
    %v633 = vpop.f32.mrf.mxu0
    %v634 = vadd.f32 0.0, %v633
    %v635 = vpop.f32.mrf.mxu0
    %v636 = vadd.f32 0.0, %v635
    %637 = vmatmul.bf16.gmra.mxu0 %v268
    %v638 = vpop.f32.mrf.mxu0
    %v639 = vadd.f32 0.0, %v638
    %v640 = vpop.f32.mrf.mxu0
    %v641 = vadd.f32 0.0, %v640
    %642 = vmatmul.bf16.gmra.mxu0 %v269
    %v643 = vpop.f32.mrf.mxu0
    %v644 = vadd.f32 0.0, %v643
    %v645 = vpop.f32.mrf.mxu0
    %v646 = vadd.f32 0.0, %v645
    %647 = vmatmul.bf16.gmra.mxu0 %v270
    %v648 = vpop.f32.mrf.mxu0
    %v649 = vadd.f32 0.0, %v648
    %v650 = vpop.f32.mrf.mxu0
    %v651 = vadd.f32 0.0, %v650
    %652 = vmatmul.bf16.gmra.mxu0 %v271
    %v653 = vpop.f32.mrf.mxu0
    %v654 = vadd.f32 0.0, %v653
    %v655 = vpop.f32.mrf.mxu0
    %v656 = vadd.f32 0.0, %v655
    %657 = vmatmul.bf16.gmra.mxu0 %v272
    %v658 = vpop.f32.mrf.mxu0
    %v659 = vadd.f32 0.0, %v658
    %v660 = vpop.f32.mrf.mxu0
    %v661 = vadd.f32 0.0, %v660
    %662 = vmatmul.bf16.gmra.mxu0 %v273
    %v663 = vpop.f32.mrf.mxu0
    %v664 = vadd.f32 0.0, %v663
    %v665 = vpop.f32.mrf.mxu0
    %v666 = vadd.f32 0.0, %v665
    %667 = vmatmul.bf16.gmra.mxu0 %v274
    %v668 = vpop.f32.mrf.mxu0
    %v669 = vadd.f32 0.0, %v668
    %v670 = vpop.f32.mrf.mxu0
    %v671 = vadd.f32 0.0, %v670
    %672 = vmatmul.bf16.gmra.mxu0 %v275
    %v673 = vpop.f32.mrf.mxu0
    %v674 = vadd.f32 0.0, %v673
    %v675 = vpop.f32.mrf.mxu0
    %v676 = vadd.f32 0.0, %v675
    %677 = vmatmul.bf16.gmra.mxu0 %v276
    %v678 = vpop.f32.mrf.mxu0
    %v679 = vadd.f32 0.0, %v678
    %v680 = vpop.f32.mrf.mxu0
    %v681 = vadd.f32 0.0, %v680
    %682 = vmatmul.bf16.gmra.mxu0 %v277
    %v683 = vpop.f32.mrf.mxu0
    %v684 = vadd.f32 0.0, %v683
    %v685 = vpop.f32.mrf.mxu0
    %v686 = vadd.f32 0.0, %v685
    %687 = vmatmul.bf16.gmra.mxu0 %v278
    %v688 = vpop.f32.mrf.mxu0
    %v689 = vadd.f32 0.0, %v688
    %v690 = vpop.f32.mrf.mxu0
    %v691 = vadd.f32 0.0, %v690
    %692 = vmatmul.bf16.gmra.mxu0 %v279
    %v693 = vpop.f32.mrf.mxu0
    %v694 = vadd.f32 0.0, %v693
    %v695 = vpop.f32.mrf.mxu0
    %v696 = vadd.f32 0.0, %v695
    %697 = vmatmul.bf16.gmra.mxu0 %v280
    %v698 = vpop.f32.mrf.mxu0
    %v699 = vadd.f32 0.0, %v698
    %v700 = vpop.f32.mrf.mxu0
    %v701 = vadd.f32 0.0, %v700
    %702 = vmatmul.bf16.gmra.mxu0 %v281
    %v703 = vpop.f32.mrf.mxu0
    %v704 = vadd.f32 0.0, %v703
    %v705 = vpop.f32.mrf.mxu0
    %v706 = vadd.f32 0.0, %v705
    %707 = vmatmul.bf16.gmra.mxu0 %v282
    %v708 = vpop.f32.mrf.mxu0
    %v709 = vadd.f32 0.0, %v708
    %v710 = vpop.f32.mrf.mxu0
    %v711 = vadd.f32 0.0, %v710
    %712 = vmatmul.bf16.gmra.mxu0 %v283
    %v713 = vpop.f32.mrf.mxu0
    %v714 = vadd.f32 0.0, %v713
    %v715 = vpop.f32.mrf.mxu0
    %v716 = vadd.f32 0.0, %v715
    %717 = vmatmul.bf16.gmra.mxu0 %v284
    %v718 = vpop.f32.mrf.mxu0
    %v719 = vadd.f32 0.0, %v718
    %v720 = vpop.f32.mrf.mxu0
    %v721 = vadd.f32 0.0, %v720
    %722 = vmatmul.bf16.gmra.mxu0 %v285
    %v723 = vpop.f32.mrf.mxu0
    %v724 = vadd.f32 0.0, %v723
    %v725 = vpop.f32.mrf.mxu0
    %v726 = vadd.f32 0.0, %v725
    %727 = vmatmul.bf16.gmra.mxu0 %v286
    %v728 = vpop.f32.mrf.mxu0
    %v729 = vadd.f32 0.0, %v728
    %v730 = vpop.f32.mrf.mxu0
    %v731 = vadd.f32 0.0, %v730
    %732 = vmatmul.bf16.gmra.mxu0 %v287
    %v733 = vpop.f32.mrf.mxu0
    %v734 = vadd.f32 0.0, %v733
    %v735 = vpop.f32.mrf.mxu0
    %v736 = vadd.f32 0.0, %v735
    %737 = vdwg.mxu0
    %v738 = vpack.c.bf16 %v410, %v410
    %v739 = vpack.c.bf16 %v412, %v412
    %v740 = vpack.c.bf16 %v415, %v415
    %v741 = vpack.c.bf16 %v417, %v417
    %v742 = vpack.c.bf16 %v420, %v420
    %v743 = vpack.c.bf16 %v422, %v422
    %v744 = vpack.c.bf16 %v425, %v425
    %v745 = vpack.c.bf16 %v427, %v427
    %v746 = vpack.c.bf16 %v430, %v430
    %v747 = vpack.c.bf16 %v432, %v432
    %v748 = vpack.c.bf16 %v435, %v435
    %v749 = vpack.c.bf16 %v437, %v437
    %v750 = vpack.c.bf16 %v440, %v440
    %v751 = vpack.c.bf16 %v442, %v442
    %v752 = vpack.c.bf16 %v445, %v445
    %v753 = vpack.c.bf16 %v447, %v447
    %v754 = vpack.c.bf16 %v450, %v450
    %v755 = vpack.c.bf16 %v452, %v452
    %v756 = vpack.c.bf16 %v455, %v455
    %v757 = vpack.c.bf16 %v457, %v457
    %v758 = vpack.c.bf16 %v460, %v460
    %v759 = vpack.c.bf16 %v462, %v462
    %v760 = vpack.c.bf16 %v465, %v465
    %v761 = vpack.c.bf16 %v467, %v467
    %v762 = vpack.c.bf16 %v470, %v470
    %v763 = vpack.c.bf16 %v472, %v472
    %v764 = vpack.c.bf16 %v475, %v475
    %v765 = vpack.c.bf16 %v477, %v477
    %v766 = vpack.c.bf16 %v480, %v480
    %v767 = vpack.c.bf16 %v482, %v482
    %v768 = vpack.c.bf16 %v485, %v485
    %v769 = vpack.c.bf16 %v487, %v487
    %v770 = vpack.c.bf16 %v490, %v490
    %v771 = vpack.c.bf16 %v492, %v492
    %v772 = vpack.c.bf16 %v495, %v495
    %v773 = vpack.c.bf16 %v497, %v497
    %v774 = vpack.c.bf16 %v500, %v500
    %v775 = vpack.c.bf16 %v502, %v502
    %v776 = vpack.c.bf16 %v505, %v505
    %v777 = vpack.c.bf16 %v507, %v507
    %v778 = vpack.c.bf16 %v510, %v510
    %v779 = vpack.c.bf16 %v512, %v512
    %v780 = vpack.c.bf16 %v515, %v515
    %v781 = vpack.c.bf16 %v517, %v517
    %v782 = vpack.c.bf16 %v520, %v520
    %v783 = vpack.c.bf16 %v522, %v522
    %v784 = vpack.c.bf16 %v525, %v525
    %v785 = vpack.c.bf16 %v527, %v527
    %v786 = vpack.c.bf16 %v530, %v530
    %v787 = vpack.c.bf16 %v532, %v532
    %v788 = vpack.c.bf16 %v535, %v535
    %v789 = vpack.c.bf16 %v537, %v537
    %v790 = vpack.c.bf16 %v540, %v540
    %v791 = vpack.c.bf16 %v542, %v542
    %v792 = vpack.c.bf16 %v545, %v545
    %v793 = vpack.c.bf16 %v547, %v547
    %v794 = vpack.c.bf16 %v550, %v550
    %v795 = vpack.c.bf16 %v552, %v552
    %v796 = vpack.c.bf16 %v555, %v555
    %v797 = vpack.c.bf16 %v557, %v557
    %v798 = vpack.c.bf16 %v560, %v560
    %v799 = vpack.c.bf16 %v562, %v562
    %v800 = vpack.c.bf16 %v565, %v565
    %v801 = vpack.c.bf16 %v567, %v567
    %802 = vst [vmem:[#allocation7] sm:$0xf] %v738
    %803 = vst [vmem:[#allocation7 + $0x4] sm:$0xf] %v739
    %804 = vst [vmem:[#allocation7 + $0x8] sm:$0xf] %v740
    %805 = vst [vmem:[#allocation7 + $0xc] sm:$0xf] %v741
    %806 = vst [vmem:[#allocation7 + $0x10] sm:$0xf] %v742
    %807 = vst [vmem:[#allocation7 + $0x14] sm:$0xf] %v743
    %808 = vst [vmem:[#allocation7 + $0x18] sm:$0xf] %v744
    %809 = vst [vmem:[#allocation7 + $0x1c] sm:$0xf] %v745
    %810 = vst [vmem:[#allocation7 + $0x20] sm:$0xf] %v746
    %811 = vst [vmem:[#allocation7 + $0x24] sm:$0xf] %v747
    %812 = vst [vmem:[#allocation7 + $0x28] sm:$0xf] %v748
    %813 = vst [vmem:[#allocation7 + $0x2c] sm:$0xf] %v749
    %814 = vst [vmem:[#allocation7 + $0x30] sm:$0xf] %v750
    %815 = vst [vmem:[#allocation7 + $0x34] sm:$0xf] %v751
    %816 = vst [vmem:[#allocation7 + $0x38] sm:$0xf] %v752
    %817 = vst [vmem:[#allocation7 + $0x3c] sm:$0xf] %v753
    %818 = vst [vmem:[#allocation7 + $0x40] sm:$0xf] %v754
    %819 = vst [vmem:[#allocation7 + $0x44] sm:$0xf] %v755
    %820 = vst [vmem:[#allocation7 + $0x48] sm:$0xf] %v756
    %821 = vst [vmem:[#allocation7 + $0x4c] sm:$0xf] %v757
    %822 = vst [vmem:[#allocation7 + $0x50] sm:$0xf] %v758
    %823 = vst [vmem:[#allocation7 + $0x54] sm:$0xf] %v759
    %824 = vst [vmem:[#allocation7 + $0x58] sm:$0xf] %v760
    %825 = vst [vmem:[#allocation7 + $0x5c] sm:$0xf] %v761
    %826 = vst [vmem:[#allocation7 + $0x60] sm:$0xf] %v762
    %827 = vst [vmem:[#allocation7 + $0x64] sm:$0xf] %v763
    %828 = vst [vmem:[#allocation7 + $0x68] sm:$0xf] %v764
    %829 = vst [vmem:[#allocation7 + $0x6c] sm:$0xf] %v765
    %830 = vst [vmem:[#allocation7 + $0x70] sm:$0xf] %v766
    %831 = vst [vmem:[#allocation7 + $0x74] sm:$0xf] %v767
    %832 = vst [vmem:[#allocation7 + $0x78] sm:$0xf] %v768
    %833 = vst [vmem:[#allocation7 + $0x7c] sm:$0xf] %v769
    %834 = vst [vmem:[#allocation7 + $0x80] sm:$0xf] %v770
    %835 = vst [vmem:[#allocation7 + $0x84] sm:$0xf] %v771
    %836 = vst [vmem:[#allocation7 + $0x88] sm:$0xf] %v772
    %837 = vst [vmem:[#allocation7 + $0x8c] sm:$0xf] %v773
    %838 = vst [vmem:[#allocation7 + $0x90] sm:$0xf] %v774
    %839 = vst [vmem:[#allocation7 + $0x94] sm:$0xf] %v775
    %840 = vst [vmem:[#allocation7 + $0x98] sm:$0xf] %v776
    %841 = vst [vmem:[#allocation7 + $0x9c] sm:$0xf] %v777
    %842 = vst [vmem:[#allocation7 + $0xa0] sm:$0xf] %v778
    %843 = vst [vmem:[#allocation7 + $0xa4] sm:$0xf] %v779
    %844 = vst [vmem:[#allocation7 + $0xa8] sm:$0xf] %v780
    %845 = vst [vmem:[#allocation7 + $0xac] sm:$0xf] %v781
    %846 = vst [vmem:[#allocation7 + $0xb0] sm:$0xf] %v782
    %847 = vst [vmem:[#allocation7 + $0xb4] sm:$0xf] %v783
    %848 = vst [vmem:[#allocation7 + $0xb8] sm:$0xf] %v784
    %849 = vst [vmem:[#allocation7 + $0xbc] sm:$0xf] %v785
    %850 = vst [vmem:[#allocation7 + $0xc0] sm:$0xf] %v786
    %851 = vst [vmem:[#allocation7 + $0xc4] sm:$0xf] %v787
    %852 = vst [vmem:[#allocation7 + $0xc8] sm:$0xf] %v788
    %853 = vst [vmem:[#allocation7 + $0xcc] sm:$0xf] %v789
    %854 = vst [vmem:[#allocation7 + $0xd0] sm:$0xf] %v790
    %855 = vst [vmem:[#allocation7 + $0xd4] sm:$0xf] %v791
    %856 = vst [vmem:[#allocation7 + $0xd8] sm:$0xf] %v792
    %857 = vst [vmem:[#allocation7 + $0xdc] sm:$0xf] %v793
    %858 = vst [vmem:[#allocation7 + $0xe0] sm:$0xf] %v794
    %859 = vst [vmem:[#allocation7 + $0xe4] sm:$0xf] %v795
    %860 = vst [vmem:[#allocation7 + $0xe8] sm:$0xf] %v796
    %861 = vst [vmem:[#allocation7 + $0xec] sm:$0xf] %v797
    %862 = vst [vmem:[#allocation7 + $0xf0] sm:$0xf] %v798
    %863 = vst [vmem:[#allocation7 + $0xf4] sm:$0xf] %v799
    %864 = vst [vmem:[#allocation7 + $0xf8] sm:$0xf] %v800
    %865 = vst [vmem:[#allocation7 + $0xfc] sm:$0xf] %v801
    %v866 = vadd.f32 %v410, %v412
    %v867 = vadd.f32 %v866, %v415
    %v868 = vadd.f32 %v867, %v417
    %v869 = vadd.f32 %v868, %v420
    %v870 = vadd.f32 %v869, %v422
    %v871 = vadd.f32 %v870, %v425
    %v872 = vadd.f32 %v871, %v427
    %v873 = vadd.f32 %v872, %v430
    %v874 = vadd.f32 %v873, %v432
    %v875 = vadd.f32 %v874, %v435
    %v876 = vadd.f32 %v875, %v437
    %v877 = vadd.f32 %v876, %v440
    %v878 = vadd.f32 %v877, %v442
    %v879 = vadd.f32 %v878, %v445
    %v880 = vadd.f32 %v879, %v447
    %v881 = vadd.f32 %v880, %v450
    %v882 = vadd.f32 %v881, %v452
    %v883 = vadd.f32 %v882, %v455
    %v884 = vadd.f32 %v883, %v457
    %v885 = vadd.f32 %v884, %v460
    %v886 = vadd.f32 %v885, %v462
    %v887 = vadd.f32 %v886, %v465
    %v888 = vadd.f32 %v887, %v467
    %v889 = vadd.f32 %v888, %v470
    %v890 = vadd.f32 %v889, %v472
    %v891 = vadd.f32 %v890, %v475
    %v892 = vadd.f32 %v891, %v477
    %v893 = vadd.f32 %v892, %v480
    %v894 = vadd.f32 %v893, %v482
    %v895 = vadd.f32 %v894, %v485
    %v896 = vadd.f32 %v895, %v487
    %v897 = vadd.f32 %v896, %v490
    %v898 = vadd.f32 %v897, %v492
    %v899 = vadd.f32 %v898, %v495
    %v900 = vadd.f32 %v899, %v497
    %v901 = vadd.f32 %v900, %v500
    %v902 = vadd.f32 %v901, %v502
    %v903 = vadd.f32 %v902, %v505
    %v904 = vadd.f32 %v903, %v507
    %v905 = vadd.f32 %v904, %v510
    %v906 = vadd.f32 %v905, %v512
    %v907 = vadd.f32 %v906, %v515
    %v908 = vadd.f32 %v907, %v517
    %v909 = vadd.f32 %v908, %v520
    %v910 = vadd.f32 %v909, %v522
    %v911 = vadd.f32 %v910, %v525
    %v912 = vadd.f32 %v911, %v527
    %v913 = vadd.f32 %v912, %v530
    %v914 = vadd.f32 %v913, %v532
    %v915 = vadd.f32 %v914, %v535
    %v916 = vadd.f32 %v915, %v537
    %v917 = vadd.f32 %v916, %v540
    %v918 = vadd.f32 %v917, %v542
    %v919 = vadd.f32 %v918, %v545
    %v920 = vadd.f32 %v919, %v547
    %v921 = vadd.f32 %v920, %v550
    %v922 = vadd.f32 %v921, %v552
    %v923 = vadd.f32 %v922, %v555
    %v924 = vadd.f32 %v923, %v557
    %v925 = vadd.f32 %v924, %v560
    %v926 = vadd.f32 %v925, %v562
    %v927 = vadd.f32 %v926, %v565
    %v928 = vadd.f32 %v927, %v567
    %v929 = vrot.slane %v928, 4
    %v930 = vadd.f32 %v928, %v929
    %v931 = vrot.slane %v930, 2
    %v932 = vadd.f32 %v930, %v931
    %v933 = vrot.slane %v932, 1
    %v934 = vadd.f32 %v932, %v933
    %v935 = vmul.f32 %v410, %v410
    %v936 = vmul.f32 %v412, %v412
    %v937 = vmul.f32 %v415, %v415
    %v938 = vmul.f32 %v417, %v417
    %v939 = vmul.f32 %v420, %v420
    %v940 = vmul.f32 %v422, %v422
    %v941 = vmul.f32 %v425, %v425
    %v942 = vmul.f32 %v427, %v427
    %v943 = vmul.f32 %v430, %v430
    %v944 = vmul.f32 %v432, %v432
    %v945 = vmul.f32 %v435, %v435
    %v946 = vmul.f32 %v437, %v437
    %v947 = vmul.f32 %v440, %v440
    %v948 = vmul.f32 %v442, %v442
    %v949 = vmul.f32 %v445, %v445
    %v950 = vmul.f32 %v447, %v447
    %v951 = vmul.f32 %v450, %v450
    %v952 = vmul.f32 %v452, %v452
    %v953 = vmul.f32 %v455, %v455
    %v954 = vmul.f32 %v457, %v457
    %v955 = vmul.f32 %v460, %v460
    %v956 = vmul.f32 %v462, %v462
    %v957 = vmul.f32 %v465, %v465
    %v958 = vmul.f32 %v467, %v467
    %v959 = vmul.f32 %v470, %v470
    %v960 = vmul.f32 %v472, %v472
    %v961 = vmul.f32 %v475, %v475
    %v962 = vmul.f32 %v477, %v477
    %v963 = vmul.f32 %v480, %v480
    %v964 = vmul.f32 %v482, %v482
    %v965 = vmul.f32 %v485, %v485
    %v966 = vmul.f32 %v487, %v487
    %v967 = vmul.f32 %v490, %v490
    %v968 = vmul.f32 %v492, %v492
    %v969 = vmul.f32 %v495, %v495
    %v970 = vmul.f32 %v497, %v497
    %v971 = vmul.f32 %v500, %v500
    %v972 = vmul.f32 %v502, %v502
    %v973 = vmul.f32 %v505, %v505
    %v974 = vmul.f32 %v507, %v507
    %v975 = vmul.f32 %v510, %v510
    %v976 = vmul.f32 %v512, %v512
    %v977 = vmul.f32 %v515, %v515
    %v978 = vmul.f32 %v517, %v517
    %v979 = vmul.f32 %v520, %v520
    %v980 = vmul.f32 %v522, %v522
    %v981 = vmul.f32 %v525, %v525
    %v982 = vmul.f32 %v527, %v527
    %v983 = vmul.f32 %v530, %v530
    %v984 = vmul.f32 %v532, %v532
    %v985 = vmul.f32 %v535, %v535
    %v986 = vmul.f32 %v537, %v537
    %v987 = vmul.f32 %v540, %v540
    %v988 = vmul.f32 %v542, %v542
    %v989 = vmul.f32 %v545, %v545
    %v990 = vmul.f32 %v547, %v547
    %v991 = vmul.f32 %v550, %v550
    %v992 = vmul.f32 %v552, %v552
    %v993 = vmul.f32 %v555, %v555
    %v994 = vmul.f32 %v557, %v557
    %v995 = vmul.f32 %v560, %v560
    %v996 = vmul.f32 %v562, %v562
    %v997 = vmul.f32 %v565, %v565
    %v998 = vmul.f32 %v567, %v567
    %v999 = vadd.f32 %v935, %v936
    %v1000 = vadd.f32 %v999, %v937
    %v1001 = vadd.f32 %v1000, %v938
    %v1002 = vadd.f32 %v1001, %v939
    %v1003 = vadd.f32 %v1002, %v940
    %v1004 = vadd.f32 %v1003, %v941
    %v1005 = vadd.f32 %v1004, %v942
    %v1006 = vadd.f32 %v1005, %v943
    %v1007 = vadd.f32 %v1006, %v944
    %v1008 = vadd.f32 %v1007, %v945
    %v1009 = vadd.f32 %v1008, %v946
    %v1010 = vadd.f32 %v1009, %v947
    %v1011 = vadd.f32 %v1010, %v948
    %v1012 = vadd.f32 %v1011, %v949
    %v1013 = vadd.f32 %v1012, %v950
    %v1014 = vadd.f32 %v1013, %v951
    %v1015 = vadd.f32 %v1014, %v952
    %v1016 = vadd.f32 %v1015, %v953
    %v1017 = vadd.f32 %v1016, %v954
    %v1018 = vadd.f32 %v1017, %v955
    %v1019 = vadd.f32 %v1018, %v956
    %v1020 = vadd.f32 %v1019, %v957
    %v1021 = vadd.f32 %v1020, %v958
    %v1022 = vadd.f32 %v1021, %v959
    %v1023 = vadd.f32 %v1022, %v960
    %v1024 = vadd.f32 %v1023, %v961
    %v1025 = vadd.f32 %v1024, %v962
    %v1026 = vadd.f32 %v1025, %v963
    %v1027 = vadd.f32 %v1026, %v964
    %v1028 = vadd.f32 %v1027, %v965
    %v1029 = vadd.f32 %v1028, %v966
    %v1030 = vadd.f32 %v1029, %v967
    %v1031 = vadd.f32 %v1030, %v968
    %v1032 = vadd.f32 %v1031, %v969
    %v1033 = vadd.f32 %v1032, %v970
    %v1034 = vadd.f32 %v1033, %v971
    %v1035 = vadd.f32 %v1034, %v972
    %v1036 = vadd.f32 %v1035, %v973
    %v1037 = vadd.f32 %v1036, %v974
    %v1038 = vadd.f32 %v1037, %v975
    %v1039 = vadd.f32 %v1038, %v976
    %v1040 = vadd.f32 %v1039, %v977
    %v1041 = vadd.f32 %v1040, %v978
    %v1042 = vadd.f32 %v1041, %v979
    %v1043 = vadd.f32 %v1042, %v980
    %v1044 = vadd.f32 %v1043, %v981
    %v1045 = vadd.f32 %v1044, %v982
    %v1046 = vadd.f32 %v1045, %v983
    %v1047 = vadd.f32 %v1046, %v984
    %v1048 = vadd.f32 %v1047, %v985
    %v1049 = vadd.f32 %v1048, %v986
    %v1050 = vadd.f32 %v1049, %v987
    %v1051 = vadd.f32 %v1050, %v988
    %v1052 = vadd.f32 %v1051, %v989
    %v1053 = vadd.f32 %v1052, %v990
    %v1054 = vadd.f32 %v1053, %v991
    %v1055 = vadd.f32 %v1054, %v992
    %v1056 = vadd.f32 %v1055, %v993
    %v1057 = vadd.f32 %v1056, %v994
    %v1058 = vadd.f32 %v1057, %v995
    %v1059 = vadd.f32 %v1058, %v996
    %v1060 = vadd.f32 %v1059, %v997
    %v1061 = vadd.f32 %v1060, %v998
    %v1062 = vrot.slane %v1061, 4
    %v1063 = vadd.f32 %v1061, %v1062
    %v1064 = vrot.slane %v1063, 2
    %v1065 = vadd.f32 %v1063, %v1064
    %v1066 = vrot.slane %v1065, 1
    %v1067 = vadd.f32 %v1065, %v1066
    %vm1068 = vcmask 1040384
    %v1069 = vsel %vm1068, %v934, %v1067
    %1070 = vst [vmem:[#allocation8] sm:$0x3] %v1069
    %v1071 = vadd.f32 %v579, %v581
    %v1072 = vadd.f32 %v1071, %v584
    %v1073 = vadd.f32 %v1072, %v586
    %v1074 = vadd.f32 %v1073, %v589
    %v1075 = vadd.f32 %v1074, %v591
    %v1076 = vadd.f32 %v1075, %v594
    %v1077 = vadd.f32 %v1076, %v596
    %v1078 = vadd.f32 %v1077, %v599
    %v1079 = vadd.f32 %v1078, %v601
    %v1080 = vadd.f32 %v1079, %v604
    %v1081 = vadd.f32 %v1080, %v606
    %v1082 = vadd.f32 %v1081, %v609
    %v1083 = vadd.f32 %v1082, %v611
    %v1084 = vadd.f32 %v1083, %v614
    %v1085 = vadd.f32 %v1084, %v616
    %v1086 = vadd.f32 %v1085, %v619
    %v1087 = vadd.f32 %v1086, %v621
    %v1088 = vadd.f32 %v1087, %v624
    %v1089 = vadd.f32 %v1088, %v626
    %v1090 = vadd.f32 %v1089, %v629
    %v1091 = vadd.f32 %v1090, %v631
    %v1092 = vadd.f32 %v1091, %v634
    %v1093 = vadd.f32 %v1092, %v636
    %v1094 = vadd.f32 %v1093, %v639
    %v1095 = vadd.f32 %v1094, %v641
    %v1096 = vadd.f32 %v1095, %v644
    %v1097 = vadd.f32 %v1096, %v646
    %v1098 = vadd.f32 %v1097, %v649
    %v1099 = vadd.f32 %v1098, %v651
    %v1100 = vadd.f32 %v1099, %v654
    %v1101 = vadd.f32 %v1100, %v656
    %v1102 = vadd.f32 %v1101, %v659
    %v1103 = vadd.f32 %v1102, %v661
    %v1104 = vadd.f32 %v1103, %v664
    %v1105 = vadd.f32 %v1104, %v666
    %v1106 = vadd.f32 %v1105, %v669
    %v1107 = vadd.f32 %v1106, %v671
    %v1108 = vadd.f32 %v1107, %v674
    %v1109 = vadd.f32 %v1108, %v676
    %v1110 = vadd.f32 %v1109, %v679
    %v1111 = vadd.f32 %v1110, %v681
    %v1112 = vadd.f32 %v1111, %v684
    %v1113 = vadd.f32 %v1112, %v686
    %v1114 = vadd.f32 %v1113, %v689
    %v1115 = vadd.f32 %v1114, %v691
    %v1116 = vadd.f32 %v1115, %v694
    %v1117 = vadd.f32 %v1116, %v696
    %v1118 = vadd.f32 %v1117, %v699
    %v1119 = vadd.f32 %v1118, %v701
    %v1120 = vadd.f32 %v1119, %v704
    %v1121 = vadd.f32 %v1120, %v706
    %v1122 = vadd.f32 %v1121, %v709
    %v1123 = vadd.f32 %v1122, %v711
    %v1124 = vadd.f32 %v1123, %v714
    %v1125 = vadd.f32 %v1124, %v716
    %v1126 = vadd.f32 %v1125, %v719
    %v1127 = vadd.f32 %v1126, %v721
    %v1128 = vadd.f32 %v1127, %v724
    %v1129 = vadd.f32 %v1128, %v726
    %v1130 = vadd.f32 %v1129, %v729
    %v1131 = vadd.f32 %v1130, %v731
    %v1132 = vadd.f32 %v1131, %v734
    %v1133 = vadd.f32 %v1132, %v736
    %v1134 = vrot.slane %v1133, 4
    %v1135 = vadd.f32 %v1133, %v1134
    %v1136 = vrot.slane %v1135, 2
    %v1137 = vadd.f32 %v1135, %v1136
    %v1138 = vrot.slane %v1137, 1
    %v1139 = vadd.f32 %v1137, %v1138
    %v1140 = vmul.f32 %v579, %v579
    %v1141 = vmul.f32 %v581, %v581
    %v1142 = vmul.f32 %v584, %v584
    %v1143 = vmul.f32 %v586, %v586
    %v1144 = vmul.f32 %v589, %v589
    %v1145 = vmul.f32 %v591, %v591
    %v1146 = vmul.f32 %v594, %v594
    %v1147 = vmul.f32 %v596, %v596
    %v1148 = vmul.f32 %v599, %v599
    %v1149 = vmul.f32 %v601, %v601
    %v1150 = vmul.f32 %v604, %v604
    %v1151 = vmul.f32 %v606, %v606
    %v1152 = vmul.f32 %v609, %v609
    %v1153 = vmul.f32 %v611, %v611
    %v1154 = vmul.f32 %v614, %v614
    %v1155 = vmul.f32 %v616, %v616
    %v1156 = vmul.f32 %v619, %v619
    %v1157 = vmul.f32 %v621, %v621
    %v1158 = vmul.f32 %v624, %v624
    %v1159 = vmul.f32 %v626, %v626
    %v1160 = vmul.f32 %v629, %v629
    %v1161 = vmul.f32 %v631, %v631
    %v1162 = vmul.f32 %v634, %v634
    %v1163 = vmul.f32 %v636, %v636
    %v1164 = vmul.f32 %v639, %v639
    %v1165 = vmul.f32 %v641, %v641
    %v1166 = vmul.f32 %v644, %v644
    %v1167 = vmul.f32 %v646, %v646
    %v1168 = vmul.f32 %v649, %v649
    %v1169 = vmul.f32 %v651, %v651
    %v1170 = vmul.f32 %v654, %v654
    %v1171 = vmul.f32 %v656, %v656
    %v1172 = vmul.f32 %v659, %v659
    %v1173 = vmul.f32 %v661, %v661
    %v1174 = vmul.f32 %v664, %v664
    %v1175 = vmul.f32 %v666, %v666
    %v1176 = vmul.f32 %v669, %v669
    %v1177 = vmul.f32 %v671, %v671
    %v1178 = vmul.f32 %v674, %v674
    %v1179 = vmul.f32 %v676, %v676
    %v1180 = vmul.f32 %v679, %v679
    %v1181 = vmul.f32 %v681, %v681
    %v1182 = vmul.f32 %v684, %v684
    %v1183 = vmul.f32 %v686, %v686
    %v1184 = vmul.f32 %v689, %v689
    %v1185 = vmul.f32 %v691, %v691
    %v1186 = vmul.f32 %v694, %v694
    %v1187 = vmul.f32 %v696, %v696
    %v1188 = vmul.f32 %v699, %v699
    %v1189 = vmul.f32 %v701, %v701
    %v1190 = vmul.f32 %v704, %v704
    %v1191 = vmul.f32 %v706, %v706
    %v1192 = vmul.f32 %v709, %v709
    %v1193 = vmul.f32 %v711, %v711
    %v1194 = vmul.f32 %v714, %v714
    %v1195 = vmul.f32 %v716, %v716
    %v1196 = vmul.f32 %v719, %v719
    %v1197 = vmul.f32 %v721, %v721
    %v1198 = vmul.f32 %v724, %v724
    %v1199 = vmul.f32 %v726, %v726
    %v1200 = vmul.f32 %v729, %v729
    %v1201 = vmul.f32 %v731, %v731
    %v1202 = vmul.f32 %v734, %v734
    %v1203 = vmul.f32 %v736, %v736
    %v1204 = vadd.f32 %v1140, %v1141
    %v1205 = vadd.f32 %v1204, %v1142
    %v1206 = vadd.f32 %v1205, %v1143
    %v1207 = vadd.f32 %v1206, %v1144
    %v1208 = vadd.f32 %v1207, %v1145
    %v1209 = vadd.f32 %v1208, %v1146
    %v1210 = vadd.f32 %v1209, %v1147
    %v1211 = vadd.f32 %v1210, %v1148
    %v1212 = vadd.f32 %v1211, %v1149
    %v1213 = vadd.f32 %v1212, %v1150
    %v1214 = vadd.f32 %v1213, %v1151
    %v1215 = vadd.f32 %v1214, %v1152
    %v1216 = vadd.f32 %v1215, %v1153
    %v1217 = vadd.f32 %v1216, %v1154
    %v1218 = vadd.f32 %v1217, %v1155
    %v1219 = vadd.f32 %v1218, %v1156
    %v1220 = vadd.f32 %v1219, %v1157
    %v1221 = vadd.f32 %v1220, %v1158
    %v1222 = vadd.f32 %v1221, %v1159
    %v1223 = vadd.f32 %v1222, %v1160
    %v1224 = vadd.f32 %v1223, %v1161
    %v1225 = vadd.f32 %v1224, %v1162
    %v1226 = vadd.f32 %v1225, %v1163
    %v1227 = vadd.f32 %v1226, %v1164
    %v1228 = vadd.f32 %v1227, %v1165
    %v1229 = vadd.f32 %v1228, %v1166
    %v1230 = vadd.f32 %v1229, %v1167
    %v1231 = vadd.f32 %v1230, %v1168
    %v1232 = vadd.f32 %v1231, %v1169
    %v1233 = vadd.f32 %v1232, %v1170
    %v1234 = vadd.f32 %v1233, %v1171
    %v1235 = vadd.f32 %v1234, %v1172
    %v1236 = vadd.f32 %v1235, %v1173
    %v1237 = vadd.f32 %v1236, %v1174
    %v1238 = vadd.f32 %v1237, %v1175
    %v1239 = vadd.f32 %v1238, %v1176
    %v1240 = vadd.f32 %v1239, %v1177
    %v1241 = vadd.f32 %v1240, %v1178
    %v1242 = vadd.f32 %v1241, %v1179
    %v1243 = vadd.f32 %v1242, %v1180
    %v1244 = vadd.f32 %v1243, %v1181
    %v1245 = vadd.f32 %v1244, %v1182
    %v1246 = vadd.f32 %v1245, %v1183
    %v1247 = vadd.f32 %v1246, %v1184
    %v1248 = vadd.f32 %v1247, %v1185
    %v1249 = vadd.f32 %v1248, %v1186
    %v1250 = vadd.f32 %v1249, %v1187
    %v1251 = vadd.f32 %v1250, %v1188
    %v1252 = vadd.f32 %v1251, %v1189
    %v1253 = vadd.f32 %v1252, %v1190
    %v1254 = vadd.f32 %v1253, %v1191
    %v1255 = vadd.f32 %v1254, %v1192
    %v1256 = vadd.f32 %v1255, %v1193
    %v1257 = vadd.f32 %v1256, %v1194
    %v1258 = vadd.f32 %v1257, %v1195
    %v1259 = vadd.f32 %v1258, %v1196
    %v1260 = vadd.f32 %v1259, %v1197
    %v1261 = vadd.f32 %v1260, %v1198
    %v1262 = vadd.f32 %v1261, %v1199
    %v1263 = vadd.f32 %v1262, %v1200
    %v1264 = vadd.f32 %v1263, %v1201
    %v1265 = vadd.f32 %v1264, %v1202
    %v1266 = vadd.f32 %v1265, %v1203
    %v1267 = vrot.slane %v1266, 4
    %v1268 = vadd.f32 %v1266, %v1267
    %v1269 = vrot.slane %v1268, 2
    %v1270 = vadd.f32 %v1268, %v1269
    %v1271 = vrot.slane %v1270, 1
    %v1272 = vadd.f32 %v1270, %v1271
    %v1273 = vsel %vm1068, %v1139, %v1272
    %1274 = vst [vmem:[#allocation10] sm:$0x3] %v1273
    // Predicated region
    $region18: #{tpu_custom_call.1} parent=1 // pred_check
      _
    $region19: #{tpu_custom_call.1} parent=1 // pred_check_branch
      %1276 = sbr.rel (0) target = $region21
    $region20: #{tpu_custom_call.1} parent=1 // pred_region
      %1278 = vsyncadd [#allocation4], 0
      %s1279 = sshll.u32 [#allocation7], 4
      %s1280 = int_to_ptr.vmem [resolvable:$true] %s1279
      %s1281 = sshll.u32 %s2, 4
      %s1282 = int_to_ptr.hbm [resolvable:$true] %s1281
      %1287 = dma.vmem_to_hbm [thread:$0]  %s1280, 4096, %s1282, [#allocation4], 64, 64, 4
    $region21: #{tpu_custom_call.1} parent=1 // pred_fallthru
      _
    // Predicated region
    $region22: #{tpu_custom_call.1} parent=1 // pred_check
      _
    $region23: #{tpu_custom_call.1} parent=1 // pred_check_branch
      %1289 = sbr.rel (0) target = $region25
    $region24: #{tpu_custom_call.1} parent=1 // pred_region
      %1291 = vsyncadd [#allocation9], 0
      %s1293 = sshll.u32 [#allocation8], 4
      %s1294 = int_to_ptr.vmem [resolvable:$true] %s1293
      %s1295 = sshll.u32 %s3, 4
      %s1296 = int_to_ptr.hbm [resolvable:$true] %s1295
      %1298 = dma.vmem_to_hbm [thread:$0]  %s1294, 32, %s1296, [#allocation9]
    $region25: #{tpu_custom_call.1} parent=1 // pred_fallthru
      _
    // Predicated region
    $region26: #{tpu_custom_call.1} parent=1 // pred_check
      _
    $region27: #{tpu_custom_call.1} parent=1 // pred_check_branch
      %1300 = sbr.rel (0) target = $region29
    $region28: #{tpu_custom_call.1} parent=1 // pred_region
      %1302 = vsyncadd [#allocation9], 0
      %s1304 = sshll.u32 [#allocation10], 4
      %s1305 = int_to_ptr.vmem [resolvable:$true] %s1304
      %s1306 = sshll.u32 %s4, 4
      %s1307 = int_to_ptr.hbm [resolvable:$true] %s1306
      %1309 = dma.vmem_to_hbm [thread:$0]  %s1305, 32, %s1307, [#allocation9]
    $region29: #{tpu_custom_call.1} parent=1 // pred_fallthru
      _
    // Predicated region
    $region30: #{tpu_custom_call.1} parent=1 // pred_check
      _
    $region31: #{tpu_custom_call.1} parent=1 // pred_check_branch
      %1311 = sbr.rel (0) target = $region33
    $region32: #{tpu_custom_call.1} parent=1 // pred_region
      %1313 = dma.done [#allocation4], 4096
    $region33: #{tpu_custom_call.1} parent=1 // pred_fallthru
      _
    // Predicated region
    $region34: #{tpu_custom_call.1} parent=1 // pred_check
      _
    $region35: #{tpu_custom_call.1} parent=1 // pred_check_branch
      %1315 = sbr.rel (0) target = $region37
    $region36: #{tpu_custom_call.1} parent=1 // pred_region
      %1317 = dma.done [#allocation9], 32
    $region37: #{tpu_custom_call.1} parent=1 // pred_fallthru
      _
    // Predicated region
    $region38: #{tpu_custom_call.1} parent=1 // pred_check
      _
    $region39: #{tpu_custom_call.1} parent=1 // pred_check_branch
      %1319 = sbr.rel (0) target = $region41
    $region40: #{tpu_custom_call.1} parent=1 // pred_region
      %1321 = dma.done [#allocation9], 32
    $region41: #{tpu_custom_call.1} parent=1 // pred_fallthru
      _
    %1322 = vsyncpa [#allocation3], 1
    %1323 = vsyncpa [#allocation6], 1
    %1324 = vsyncpa [#allocation4], 1
    %1325 = vsyncpa [#allocation9], 1

</llo_original>
